<compile_context>
chip_gen: v5e
topology: v5e:2x2
jax: 0.10.0
libtpu: 0.0.40
codegen_flags: <defaults>
</compile_context>

<pallas_src>
import jax
import jax.numpy as jnp
from jax.experimental import pallas as pl
from jax.experimental.pallas import tpu as pltpu


def _codah_head_kernel(bert_ref, obj_ref, coord_ref, attri_ref,
                       w_obj_ref, w_pos_ref, w_att_ref, w_attcls_ref,
                       bias_ref, out_ref):
    # bert_ref   : (1, TB)            lane-dense bert logits
    # obj_ref    : (TB, T*C_obj)      flattened obj logits
    # coord_ref  : (TB, T*G)          flattened coord logits
    # attri_ref  : (TB, T*S2, G)      flattened attri logits
    # w_obj_ref  : (1, T*C_obj)       obj_cls weight tiled T times
    # w_pos_ref  : (1, T*G)           pos_cls weight tiled T times
    # w_att_ref  : (T*S2, G)          att_layer weight tiled over T, broadcast over G
    # w_attcls_ref: (1, G)            att_cls weight
    # bias_ref   : (4,) in SMEM       [b_obj, b_pos, b_att, b_attcls]
    # out_ref    : (1, TB)            lane-dense output

    # obj head: fused sum-over-T + Linear(C_obj -> 1) == lane-dense weighted reduce.
    obj_l = jnp.sum(obj_ref[...] * w_obj_ref[...], axis=-1)          # (TB,)

    # pos head: fused sum-over-T + Linear(G -> 1).
    coord_l = jnp.sum(coord_ref[...] * w_pos_ref[...], axis=-1)      # (TB,)

    # att head: contract T and S2 against att_layer weight (keeping G), add bias,
    # ReLU, then contract G against att_cls weight.
    att = jnp.sum(attri_ref[...] * w_att_ref[...][None, :, :], axis=1)   # (TB, G)
    att = jnp.maximum(att + bias_ref[2], 0.0)                             # ReLU (post-bias)
    att_l = jnp.sum(att * w_attcls_ref[...], axis=-1)                     # (TB,)

    # cat([bert, obj, coord, att], dim=1) then sum over dim=1.
    total = (bert_ref[0, :] + obj_l + coord_l + att_l
             + bias_ref[0] + bias_ref[1] + bias_ref[3])                   # (TB,)
    out_ref[...] = total[None, :]                                         # (1, TB)


def _pick_batch_tile(B, row_bytes):
    """Batch tile: single block for small B, else a multiple of 128 sized so the
    double-buffered input footprint stays ~<=24 MiB (safe on v7x's 64 MiB VMEM /
    32 MiB default scope; plenty of headroom on v5e/v6e)."""
    if B <= 128:
        return B
    budget = 24 * 1024 * 1024
    tb = min(B, max(128, budget // (2 * row_bytes)), 1024)
    tb = max(128, (tb // 128) * 128)   # lane-dense bert/output blocks need TB % 128 == 0
    return tb


def codah_head(bert_logits, obj_logits, coord_logits, attri_logits, params):
    """Pallas implementation of CodahClassifier.forward (head part). Returns [B]."""
    B = bert_logits.shape[0]
    _, T, C = obj_logits.shape
    G = coord_logits.shape[2]
    S2 = attri_logits.shape[2]
    assert attri_logits.shape == (B, T, S2, G)
    f32 = jnp.float32

    # Lane-dense flattened views (layout plumbing only, done once in the wrapper).
    bert2d = bert_logits.reshape(1, B).astype(f32)
    obj_flat = obj_logits.reshape(B, T * C).astype(f32)
    coord_flat = coord_logits.reshape(B, T * G).astype(f32)
    attri_flat = attri_logits.reshape(B, T * S2, G).astype(f32)

    # Fold the sum-over-T into the heads by tiling / broadcasting the tiny weights.
    w_obj_t = jnp.tile(params["w_obj"].reshape(1, C), (1, T)).astype(f32)      # (1, T*C)
    w_pos_t = jnp.tile(params["w_pos"].reshape(1, G), (1, T)).astype(f32)      # (1, T*G)
    w_att_b = jnp.broadcast_to(
        jnp.tile(params["w_att"].reshape(S2), (T,))[:, None], (T * S2, G)
    ).astype(f32)                                                              # (T*S2, G)
    w_attcls = params["w_attcls"].reshape(1, G).astype(f32)                    # (1, G)
    biases = jnp.stack([params["b_obj"].reshape(()),
                        params["b_pos"].reshape(()),
                        params["b_att"].reshape(()),
                        params["b_attcls"].reshape(())]).astype(f32)           # (4,) -> SMEM

    row_bytes = 4 * (1 + T * C + T * G + T * S2 * G + 1)
    TB = _pick_batch_tile(B, row_bytes)
    grid = (pl.cdiv(B, TB),)

    # Advisory cost hint: this head is pure HBM streaming of the logits tensors.
    cost = pl.CostEstimate(
        flops=int(2 * B * (T * C + T * G + T * S2 * G + G)),
        transcendentals=0,
        bytes_accessed=int(4 * (B * (1 + T * C + T * G + T * S2 * G + 1)
                                + T * C + T * G + T * S2 * G + G + 4)),
    )

    out = pl.pallas_call(
        _codah_head_kernel,
        out_shape=jax.ShapeDtypeStruct((1, B), f32),
        grid=grid,
        in_specs=[
            pl.BlockSpec((1, TB), lambda i: (0, i)),            # bert (lane-dense)
            pl.BlockSpec((TB, T * C), lambda i: (i, 0)),        # obj_flat
            pl.BlockSpec((TB, T * G), lambda i: (i, 0)),        # coord_flat
            pl.BlockSpec((TB, T * S2, G), lambda i: (i, 0, 0)), # attri_flat
            pl.BlockSpec((1, T * C), lambda i: (0, 0)),         # w_obj tiled
            pl.BlockSpec((1, T * G), lambda i: (0, 0)),         # w_pos tiled
            pl.BlockSpec((T * S2, G), lambda i: (0, 0)),        # w_att tiled/broadcast
            pl.BlockSpec((1, G), lambda i: (0, 0)),             # w_attcls
            pl.BlockSpec(memory_space=pltpu.MemorySpace.SMEM),  # biases as scalars
        ],
        out_specs=pl.BlockSpec((1, TB), lambda i: (0, i)),
        compiler_params=pltpu.CompilerParams(
            dimension_semantics=("parallel",)),
        cost_estimate=cost,
    )(bert2d, obj_flat, coord_flat, attri_flat,
      w_obj_t, w_pos_t, w_att_b, w_attcls, biases)
    return out[0]


def _reference(bert_logits, obj_logits, coord_logits, attri_logits, p):
    obj = jnp.sum(obj_logits, axis=1) @ p["w_obj"].T + p["b_obj"][0]
    coord = jnp.sum(coord_logits, axis=1) @ p["w_pos"].T + p["b_pos"][0]
    attri = jnp.sum(attri_logits, axis=1)                       # [B, S2, G]
    attri = jnp.transpose(attri, (0, 2, 1))                     # [B, G, S2]
    attri = attri @ p["w_att"].T + p["b_att"][0]                # [B, G, 1]
    attri = jax.nn.relu(attri[:, :, 0])                         # [B, G]
    attri = attri @ p["w_attcls"].T + p["b_attcls"][0]          # [B, 1]
    return jnp.sum(jnp.concatenate([bert_logits, obj, coord, attri], axis=1), axis=1)


if __name__ == "__main__":
    # Small config consistent with the module:
    #   db.cfg.output_cls_size = 32, db.cfg.num_scales = 2, db.cfg.grid_size = (8, 8)
    B, T = 2, 8
    C_OBJ = 32
    S2 = 2 * 2          # num_scales * 2
    G = 8 * 8           # grid_size[0] ** 2

    key = jax.random.PRNGKey(0)
    ks = jax.random.split(key, 12)

    # Synthetic submodule outputs (BERT + DrawModel.inference surrogates).
    bert_logits = jax.random.normal(ks[0], (B, 1), jnp.float32)
    obj_logits = jax.random.normal(ks[1], (B, T, C_OBJ), jnp.float32)
    coord_logits = jax.random.normal(ks[2], (B, T, G), jnp.float32)
    attri_logits = jax.random.normal(ks[3], (B, T, S2, G), jnp.float32)

    # Deterministic head parameters (nn.Linear: weight [1, in], bias [1]).
    def linear_init(kw, kb, fan_in):
        bound = 1.0 / jnp.sqrt(fan_in)
        w = jax.random.uniform(kw, (1, fan_in), jnp.float32, -bound, bound)
        b = jax.random.uniform(kb, (1, 1), jnp.float32, -bound, bound)
        return w, b

    w_obj, b_obj = linear_init(ks[4], ks[5], C_OBJ)      # obj_cls
    w_att, b_att = linear_init(ks[6], ks[7], S2)         # att_layer
    w_attcls, b_attcls = linear_init(ks[8], ks[9], G)    # att_cls
    w_pos, b_pos = linear_init(ks[10], ks[11], G)        # pos_cls

    params = dict(w_obj=w_obj, b_obj=b_obj, w_pos=w_pos, b_pos=b_pos,
                  w_att=w_att, b_att=b_att, w_attcls=w_attcls, b_attcls=b_attcls)

    out = codah_head(bert_logits, obj_logits, coord_logits, attri_logits, params)
    out = jax.block_until_ready(out)

    ref = _reference(bert_logits, obj_logits, coord_logits, attri_logits, params)
    assert out.shape == (B,)
    assert jnp.allclose(out, ref, atol=1e-4, rtol=1e-4), (out, ref)
    print("KERNEL_OK")
</pallas_src>

<mosaic_0001>
module attributes {stable_mosaic.version = 11 : i64} {
  func.func @_codah_head_kernel(%arg0: i32, %arg1: memref<1x2xf32, #tpu.memory_space<vmem>>, %arg2: memref<2x256xf32, #tpu.memory_space<vmem>>, %arg3: memref<2x512xf32, #tpu.memory_space<vmem>>, %arg4: memref<2x32x64xf32, #tpu.memory_space<vmem>>, %arg5: memref<1x256xf32, #tpu.memory_space<vmem>>, %arg6: memref<1x512xf32, #tpu.memory_space<vmem>>, %arg7: memref<32x64xf32, #tpu.memory_space<vmem>>, %arg8: memref<1x64xf32, #tpu.memory_space<vmem>>, %arg9: memref<4xf32, #tpu.memory_space<smem>>, %arg10: memref<1x2xf32, #tpu.memory_space<vmem>>) attributes {dimension_semantics = [#tpu.dimension_semantics<parallel>], iteration_bounds = array<i64: 1>, scalar_prefetch = 0 : i64, scratch_operands = 0 : i64, tpu.core_type = #tpu.core_type<tc>, window_params = [{transform_indices = @transform_0, window_bounds = array<i64: 1, 2>}, {transform_indices = @transform_1, window_bounds = array<i64: 2, 256>}, {transform_indices = @transform_2, window_bounds = array<i64: 2, 512>}, {transform_indices = @transform_3, window_bounds = array<i64: 2, 32, 64>}, {pipeline_mode = #tpu.pipeline_mode<synchronous>, transform_indices = @transform_4, window_bounds = array<i64: 1, 256>}, {pipeline_mode = #tpu.pipeline_mode<synchronous>, transform_indices = @transform_5, window_bounds = array<i64: 1, 512>}, {pipeline_mode = #tpu.pipeline_mode<synchronous>, transform_indices = @transform_6, window_bounds = array<i64: 32, 64>}, {pipeline_mode = #tpu.pipeline_mode<synchronous>, transform_indices = @transform_7, window_bounds = array<i64: 1, 64>}, {transform_indices = @transform_8, window_bounds = array<i64: 4>}, {transform_indices = @transform_9, window_bounds = array<i64: 1, 2>}]} {
    %c0 = arith.constant 0 : index
    %c0_0 = arith.constant 0 : index
    %0 = vector.load %arg2[%c0, %c0_0] : memref<2x256xf32, #tpu.memory_space<vmem>>, vector<2x256xf32>
    %c0_1 = arith.constant 0 : index
    %c0_2 = arith.constant 0 : index
    %1 = vector.load %arg5[%c0_1, %c0_2] : memref<1x256xf32, #tpu.memory_space<vmem>>, vector<1x256xf32>
    %2 = vector.broadcast %1 : vector<1x256xf32> to vector<2x256xf32>
    %3 = arith.mulf %0, %2 : vector<2x256xf32>
    %cst = arith.constant dense<0.000000e+00> : vector<2xf32>
    %4 = vector.multi_reduction <add>, %3, %cst [1] : vector<2x256xf32> to vector<2xf32>
    %c0_3 = arith.constant 0 : index
    %c0_4 = arith.constant 0 : index
    %5 = vector.load %arg3[%c0_3, %c0_4] : memref<2x512xf32, #tpu.memory_space<vmem>>, vector<2x512xf32>
    %c0_5 = arith.constant 0 : index
    %c0_6 = arith.constant 0 : index
    %6 = vector.load %arg6[%c0_5, %c0_6] : memref<1x512xf32, #tpu.memory_space<vmem>>, vector<1x512xf32>
    %7 = vector.broadcast %6 : vector<1x512xf32> to vector<2x512xf32>
    %8 = arith.mulf %5, %7 : vector<2x512xf32>
    %cst_7 = arith.constant dense<0.000000e+00> : vector<2xf32>
    %9 = vector.multi_reduction <add>, %8, %cst_7 [1] : vector<2x512xf32> to vector<2xf32>
    %c0_8 = arith.constant 0 : index
    %c0_9 = arith.constant 0 : index
    %c0_10 = arith.constant 0 : index
    %10 = vector.load %arg4[%c0_8, %c0_9, %c0_10] : memref<2x32x64xf32, #tpu.memory_space<vmem>>, vector<2x32x64xf32>
    %c0_11 = arith.constant 0 : index
    %c0_12 = arith.constant 0 : index
    %11 = vector.load %arg7[%c0_11, %c0_12] : memref<32x64xf32, #tpu.memory_space<vmem>>, vector<32x64xf32>
    %12 = vector.shape_cast %11 : vector<32x64xf32> to vector<1x32x64xf32>
    %13 = vector.broadcast %12 : vector<1x32x64xf32> to vector<2x32x64xf32>
    %14 = arith.mulf %10, %13 : vector<2x32x64xf32>
    %cst_13 = arith.constant dense<0.000000e+00> : vector<2x64xf32>
    %15 = vector.multi_reduction <add>, %14, %cst_13 [1] : vector<2x32x64xf32> to vector<2x64xf32>
    %c2 = arith.constant 2 : index
    %16 = memref.load %arg9[%c2] : memref<4xf32, #tpu.memory_space<smem>>
    %17 = vector.broadcast %16 : f32 to vector<2x64xf32>
    %18 = arith.addf %15, %17 : vector<2x64xf32>
    %cst_14 = arith.constant 0.000000e+00 : f32
    %19 = vector.broadcast %cst_14 : f32 to vector<2x64xf32>
    %20 = arith.maximumf %18, %19 : vector<2x64xf32>
    %c0_15 = arith.constant 0 : index
    %c0_16 = arith.constant 0 : index
    %21 = vector.load %arg8[%c0_15, %c0_16] : memref<1x64xf32, #tpu.memory_space<vmem>>, vector<1x64xf32>
    %22 = vector.broadcast %21 : vector<1x64xf32> to vector<2x64xf32>
    %23 = arith.mulf %20, %22 : vector<2x64xf32>
    %cst_17 = arith.constant dense<0.000000e+00> : vector<2xf32>
    %24 = vector.multi_reduction <add>, %23, %cst_17 [1] : vector<2x64xf32> to vector<2xf32>
    %c0_18 = arith.constant 0 : index
    %c0_19 = arith.constant 0 : index
    %25 = vector.load %arg1[%c0_18, %c0_19] : memref<1x2xf32, #tpu.memory_space<vmem>>, vector<1x2xf32>
    %26 = vector.shape_cast %25 : vector<1x2xf32> to vector<2xf32>
    %27 = arith.addf %26, %4 : vector<2xf32>
    %28 = arith.addf %27, %9 : vector<2xf32>
    %29 = arith.addf %28, %24 : vector<2xf32>
    %c0_20 = arith.constant 0 : index
    %30 = memref.load %arg9[%c0_20] : memref<4xf32, #tpu.memory_space<smem>>
    %31 = vector.broadcast %30 : f32 to vector<2xf32>
    %32 = arith.addf %29, %31 : vector<2xf32>
    %c1 = arith.constant 1 : index
    %33 = memref.load %arg9[%c1] : memref<4xf32, #tpu.memory_space<smem>>
    %34 = vector.broadcast %33 : f32 to vector<2xf32>
    %35 = arith.addf %32, %34 : vector<2xf32>
    %c3 = arith.constant 3 : index
    %36 = memref.load %arg9[%c3] : memref<4xf32, #tpu.memory_space<smem>>
    %37 = vector.broadcast %36 : f32 to vector<2xf32>
    %38 = arith.addf %35, %37 : vector<2xf32>
    %39 = vector.shape_cast %38 : vector<2xf32> to vector<1x2xf32>
    %c0_21 = arith.constant 0 : index
    %c0_22 = arith.constant 0 : index
    %40 = vector.load %arg10[%c0_21, %c0_22] : memref<1x2xf32, #tpu.memory_space<vmem>>, vector<1x2xf32>
    tpu.vector_store %arg10[%c0_21, %c0_22], %39 {strides = array<i32>} : memref<1x2xf32, #tpu.memory_space<vmem>>, vector<1x2xf32>,
    return
  }
  func.func @transform_0(%arg0: i32) -> (i32, i32) {
    %c0_i32 = arith.constant 0 : i32
    %c0_i32_0 = arith.constant 0 : i32
    return %c0_i32, %arg0 : i32, i32
  }
  func.func @transform_1(%arg0: i32) -> (i32, i32) {
    %c0_i32 = arith.constant 0 : i32
    %c0_i32_0 = arith.constant 0 : i32
    return %arg0, %c0_i32 : i32, i32
  }
  func.func @transform_2(%arg0: i32) -> (i32, i32) {
    %c0_i32 = arith.constant 0 : i32
    %c0_i32_0 = arith.constant 0 : i32
    return %arg0, %c0_i32 : i32, i32
  }
  func.func @transform_3(%arg0: i32) -> (i32, i32, i32) {
    %c0_i32 = arith.constant 0 : i32
    %c0_i32_0 = arith.constant 0 : i32
    %c0_i32_1 = arith.constant 0 : i32
    return %arg0, %c0_i32, %c0_i32_0 : i32, i32, i32
  }
  func.func @transform_4(%arg0: i32) -> (i32, i32) {
    %c0_i32 = arith.constant 0 : i32
    %c0_i32_0 = arith.constant 0 : i32
    %c0_i32_1 = arith.constant 0 : i32
    return %c0_i32, %c0_i32_0 : i32, i32
  }
  func.func @transform_5(%arg0: i32) -> (i32, i32) {
    %c0_i32 = arith.constant 0 : i32
    %c0_i32_0 = arith.constant 0 : i32
    %c0_i32_1 = arith.constant 0 : i32
    return %c0_i32, %c0_i32_0 : i32, i32
  }
  func.func @transform_6(%arg0: i32) -> (i32, i32) {
    %c0_i32 = arith.constant 0 : i32
    %c0_i32_0 = arith.constant 0 : i32
    %c0_i32_1 = arith.constant 0 : i32
    return %c0_i32, %c0_i32_0 : i32, i32
  }
  func.func @transform_7(%arg0: i32) -> (i32, i32) {
    %c0_i32 = arith.constant 0 : i32
    %c0_i32_0 = arith.constant 0 : i32
    %c0_i32_1 = arith.constant 0 : i32
    return %c0_i32, %c0_i32_0 : i32, i32
  }
  func.func @transform_8(%arg0: i32) -> i32 {
    %c0_i32 = arith.constant 0 : i32
    %c0_i32_0 = arith.constant 0 : i32
    return %c0_i32 : i32
  }
  func.func @transform_9(%arg0: i32) -> (i32, i32) {
    %c0_i32 = arith.constant 0 : i32
    %c0_i32_0 = arith.constant 0 : i32
    return %c0_i32, %arg0 : i32, i32
  }
}

</mosaic_0001>

<llo_original>
// kernel: tpu_custom_call.1
$region0: #{tpu_custom_call.1}
  #allocation0 [shape = 'u32[]', space=smem, size = 0x4, offset = 0x4, fixed_abs, tag = 'smem constant byte address 0x4 - core index']
  #allocation1 [shape = 'u32[72,128]{1,0:T(1,128)}', space=vmem, size = 0x9000, scoped, tag = 'internal scratch']
  %s0 = inlined_call_operand.hbm [shape: f32[1,2], index: 0, kind: input, shape index: {}]
  %s1 = inlined_call_operand.hbm [shape: f32[2,256], index: 1, kind: input, shape index: {}]
  %s2 = inlined_call_operand.hbm [shape: f32[2,512], index: 2, kind: input, shape index: {}]
  %s3 = inlined_call_operand.hbm [shape: f32[2,32,64], index: 3, kind: input, shape index: {}]
  %s4 = inlined_call_operand.hbm [shape: f32[1,256], index: 4, kind: input, shape index: {}]
  %s5 = inlined_call_operand.vmem [shape: f32[1,512], index: 5, kind: input, shape index: {}]
  %s6 = inlined_call_operand.hbm [shape: f32[32,64], index: 6, kind: input, shape index: {}]
  %s7 = inlined_call_operand.vmem [shape: f32[1,64], index: 7, kind: input, shape index: {}]
  %s8 = inlined_call_operand.vmem [shape: f32[4], index: 8, kind: input, shape index: {}]
  %s9 = inlined_call_operand.hbm [shape: f32[1,2], index: 9, kind: output, shape index: {}]
  %s10 = sld [smem:[#allocation0]]
  $region74: #{tpu_custom_call.1} parent=0
    _
  %s12 = ssub.s32 1, %s10
  %s13 = scalar_select 0, %s12, %s10
  $region1: #{tpu_custom_call.1} parent=0
    #allocation2 [shape = 'u8[512]{0}', space=vmem, size = 0x400, scoped, tag = 'input window, operand 0, single buffered']
    #allocation3 [shape = 's32[1]{0}', space=sflag, size = 0x4, scoped, tag = 'scoped memory for tpu_custom_call.1']
    #allocation4 [shape = 's32[1]{0}', space=sflag, size = 0x4, scoped, tag = 'scoped memory for tpu_custom_call.1']
    #allocation5 [shape = 's32[1]{0}', space=sflag, size = 0x4, scoped, tag = 'scoped memory for tpu_custom_call.1']
    #allocation6 [shape = 'u8[2048]{0}', space=vmem, size = 0x800, scoped, tag = 'input window, operand 1, single buffered']
    #allocation7 [shape = 's32[1]{0}', space=sflag, size = 0x4, scoped, tag = 'scoped memory for tpu_custom_call.1']
    #allocation8 [shape = 'u8[4096]{0}', space=vmem, size = 0x1000, scoped, tag = 'input window, operand 2, single buffered']
    #allocation9 [shape = 'u8[32768]{0}', space=vmem, size = 0x8000, scoped, tag = 'input window, operand 3, single buffered']
    #allocation10 [shape = 's32[1]{0}', space=sflag, size = 0x4, scoped, tag = 'scoped memory for tpu_custom_call.1']
    #allocation11 [shape = 'u8[1024]{0}', space=vmem, size = 0x400, scoped, tag = 'input window, operand 4, single buffered']
    #allocation12 [shape = 'u8[16384]{0}', space=vmem, size = 0x4000, scoped, tag = 'input window, operand 6, single buffered']
    #allocation13 [shape = 's32[1]{0}', space=sflag, size = 0x4, scoped, tag = 'scoped memory for tpu_custom_call.1']
    #allocation14 [shape = 'u8[512]{0}', space=smem, size = 0x200, scoped, tag = 'input window, operand 8, single buffered']
    #allocation15 [shape = 'u8[512]{0}', space=vmem, size = 0x400, scoped, tag = 'output window, operand 0, single buffered']
    %14 = vsyncpa [#allocation3], 0
    %15 = vsyncpa [#allocation7], 0
    %16 = vsyncpa [#allocation10], 0
    %17 = vsyncpa [#allocation13], 0
    %18 = vsyncpa [#allocation5], 0
    %19 = vsyncpa [#allocation4], 0
    // Predicated region
    $region2: #{tpu_custom_call.1} parent=1 // pred_check
      _
    $region3: #{tpu_custom_call.1} parent=1 // pred_check_branch
      %21 = sbr.rel (0) target = $region5
    $region4: #{tpu_custom_call.1} parent=1 // pred_region
      %23 = vsyncadd [#allocation3], 0
      %s25 = sshll.u32 %s0, 4
      %s26 = int_to_ptr.hbm [resolvable:$true] %s25
      %s27 = sshll.u32 [#allocation2], 4
      %s28 = int_to_ptr.vmem [resolvable:$true] %s27
      %30 = dma.hbm_to_vmem [thread:$0]  %s26, 16, %s28, [#allocation3]
    $region5: #{tpu_custom_call.1} parent=1 // pred_fallthru
      _
    // Predicated region
    $region6: #{tpu_custom_call.1} parent=1 // pred_check
      _
    $region7: #{tpu_custom_call.1} parent=1 // pred_check_branch
      %32 = sbr.rel (0) target = $region9
    $region8: #{tpu_custom_call.1} parent=1 // pred_region
      %34 = vsyncadd [#allocation7], 0
      %s36 = sshll.u32 %s1, 4
      %s37 = int_to_ptr.hbm [resolvable:$true] %s36
      %s38 = sshll.u32 [#allocation6], 4
      %s39 = int_to_ptr.vmem [resolvable:$true] %s38
      %41 = dma.hbm_to_vmem [thread:$0]  %s37, 64, %s39, [#allocation7]
    $region9: #{tpu_custom_call.1} parent=1 // pred_fallthru
      _
    // Predicated region
    $region10: #{tpu_custom_call.1} parent=1 // pred_check
      _
    $region11: #{tpu_custom_call.1} parent=1 // pred_check_branch
      %43 = sbr.rel (0) target = $region13
    $region12: #{tpu_custom_call.1} parent=1 // pred_region
      %45 = vsyncadd [#allocation7], 0
      %s47 = sshll.u32 %s2, 4
      %s48 = int_to_ptr.hbm [resolvable:$true] %s47
      %s49 = sshll.u32 [#allocation8], 4
      %s50 = int_to_ptr.vmem [resolvable:$true] %s49
      %52 = dma.hbm_to_vmem [thread:$0]  %s48, 128, %s50, [#allocation7]
    $region13: #{tpu_custom_call.1} parent=1 // pred_fallthru
      _
    // Predicated region
    $region14: #{tpu_custom_call.1} parent=1 // pred_check
      _
    $region15: #{tpu_custom_call.1} parent=1 // pred_check_branch
      %54 = sbr.rel (0) target = $region17
    $region16: #{tpu_custom_call.1} parent=1 // pred_region
      %56 = vsyncadd [#allocation10], 0
      %s57 = sshll.u32 %s3, 4
      %s58 = int_to_ptr.hbm [resolvable:$true] %s57
      %s59 = sshll.u32 [#allocation9], 4
      %s60 = int_to_ptr.vmem [resolvable:$true] %s59
      %65 = dma.hbm_to_vmem [thread:$0]  %s58, 1024, %s60, [#allocation10], 128, 128, 8
    $region17: #{tpu_custom_call.1} parent=1 // pred_fallthru
      _
    // Predicated region
    $region18: #{tpu_custom_call.1} parent=1 // pred_check
      _
    $region19: #{tpu_custom_call.1} parent=1 // pred_check_branch
      %67 = sbr.rel (0) target = $region21
    $region20: #{tpu_custom_call.1} parent=1 // pred_region
      %69 = vsyncadd [#allocation10], 0
      %s71 = sshll.u32 %s4, 4
      %s72 = int_to_ptr.hbm [resolvable:$true] %s71
      %s73 = sshll.u32 [#allocation11], 4
      %s74 = int_to_ptr.vmem [resolvable:$true] %s73
      %76 = dma.hbm_to_vmem [thread:$0]  %s72, 32, %s74, [#allocation10]
    $region21: #{tpu_custom_call.1} parent=1 // pred_fallthru
      _
    // Predicated region
    $region22: #{tpu_custom_call.1} parent=1 // pred_check
      _
    $region23: #{tpu_custom_call.1} parent=1 // pred_check_branch
      %78 = sbr.rel (0) target = $region25
    $region24: #{tpu_custom_call.1} parent=1 // pred_region
      _
    $region25: #{tpu_custom_call.1} parent=1 // pred_fallthru
      _
    // Predicated region
    $region26: #{tpu_custom_call.1} parent=1 // pred_check
      _
    $region27: #{tpu_custom_call.1} parent=1 // pred_check_branch
      %80 = sbr.rel (0) target = $region29
    $region28: #{tpu_custom_call.1} parent=1 // pred_region
      %82 = vsyncadd [#allocation13], 0
      %s83 = sshll.u32 %s6, 4
      %s84 = int_to_ptr.hbm [resolvable:$true] %s83
      %s85 = sshll.u32 [#allocation12], 4
      %s86 = int_to_ptr.vmem [resolvable:$true] %s85
      %91 = dma.hbm_to_vmem [thread:$0]  %s84, 512, %s86, [#allocation13], 128, 128, 8
    $region29: #{tpu_custom_call.1} parent=1 // pred_fallthru
      _
    // Predicated region
    $region30: #{tpu_custom_call.1} parent=1 // pred_check
      _
    $region31: #{tpu_custom_call.1} parent=1 // pred_check_branch
      %93 = sbr.rel (0) target = $region33
    $region32: #{tpu_custom_call.1} parent=1 // pred_region
      _
    $region33: #{tpu_custom_call.1} parent=1 // pred_fallthru
      _
    // Predicated region
    $region34: #{tpu_custom_call.1} parent=1 // pred_check
      _
    $region35: #{tpu_custom_call.1} parent=1 // pred_check_branch
      %95 = sbr.rel (0) target = $region37
    $region36: #{tpu_custom_call.1} parent=1 // pred_region
      %97 = vsyncadd [#allocation5], 0
      %s99 = sshll.u32 %s8, 4
      %s100 = int_to_ptr.vmem [resolvable:$true] %s99
      %102 = dma.vmem_to_smem %s100, 16, [#allocation14], [#allocation5]
    $region37: #{tpu_custom_call.1} parent=1 // pred_fallthru
      _
    // Predicated region
    $region38: #{tpu_custom_call.1} parent=1 // pred_check
      _
    $region39: #{tpu_custom_call.1} parent=1 // pred_check_branch
      %104 = sbr.rel (0) target = $region41
    $region40: #{tpu_custom_call.1} parent=1 // pred_region
      %106 = dma.done [#allocation3], 16
    $region41: #{tpu_custom_call.1} parent=1 // pred_fallthru
      _
    // Predicated region
    $region42: #{tpu_custom_call.1} parent=1 // pred_check
      _
    $region43: #{tpu_custom_call.1} parent=1 // pred_check_branch
      %108 = sbr.rel (0) target = $region45
    $region44: #{tpu_custom_call.1} parent=1 // pred_region
      %110 = dma.done [#allocation7], 64
    $region45: #{tpu_custom_call.1} parent=1 // pred_fallthru
      _
    // Predicated region
    $region46: #{tpu_custom_call.1} parent=1 // pred_check
      _
    $region47: #{tpu_custom_call.1} parent=1 // pred_check_branch
      %112 = sbr.rel (0) target = $region49
    $region48: #{tpu_custom_call.1} parent=1 // pred_region
      %114 = dma.done [#allocation7], 128
    $region49: #{tpu_custom_call.1} parent=1 // pred_fallthru
      _
    // Predicated region
    $region50: #{tpu_custom_call.1} parent=1 // pred_check
      _
    $region51: #{tpu_custom_call.1} parent=1 // pred_check_branch
      %116 = sbr.rel (0) target = $region53
    $region52: #{tpu_custom_call.1} parent=1 // pred_region
      %118 = dma.done [#allocation10], 1024
    $region53: #{tpu_custom_call.1} parent=1 // pred_fallthru
      _
    // Predicated region
    $region54: #{tpu_custom_call.1} parent=1 // pred_check
      _
    $region55: #{tpu_custom_call.1} parent=1 // pred_check_branch
      %120 = sbr.rel (0) target = $region57
    $region56: #{tpu_custom_call.1} parent=1 // pred_region
      %122 = dma.done [#allocation10], 32
    $region57: #{tpu_custom_call.1} parent=1 // pred_fallthru
      _
    // Predicated region
    $region58: #{tpu_custom_call.1} parent=1 // pred_check
      _
    $region59: #{tpu_custom_call.1} parent=1 // pred_check_branch
      %124 = sbr.rel (0) target = $region61
    $region60: #{tpu_custom_call.1} parent=1 // pred_region
      %126 = dma.done [#allocation13], 512
    $region61: #{tpu_custom_call.1} parent=1 // pred_fallthru
      _
    // Predicated region
    $region62: #{tpu_custom_call.1} parent=1 // pred_check
      _
    $region63: #{tpu_custom_call.1} parent=1 // pred_check_branch
      %128 = sbr.rel (0) target = $region65
    $region64: #{tpu_custom_call.1} parent=1 // pred_region
      %130 = dma.done [#allocation5], 16
    $region65: #{tpu_custom_call.1} parent=1 // pred_fallthru
      _
    %131 = sfence
    %v132 = vld [vmem:[#allocation6] sm:$0xf]
    %v133 = vld [vmem:[#allocation11] sm:$0x3]
    %v135 = vperm.slane %v133, 0
    %v136 = vperm.slane %v133, 1
    %v137 = vrot.slane %v136, 6
    %vm138 = vcmask 1041408
    %v139 = vsel %vm138, %v135, %v137
    %v141 = vmul.f32 %v132, %v139
    %143 = vst [vmem:[#allocation1] ss:$4 sm:$0xff] %v141
    %v144 = vld.sshfl [vmem:[#allocation1] sm:$0xff pattern:$0x73625140]
    %v145 = vld.sshfl [vmem:[#allocation1 + $0x8] sm:$0xff pattern:$0x73625140]
    %v148 = vsel %vm138, %v144, 0.0
    %v149 = vsel %vm138, %v145, 0.0
    %v150 = vadd.f32 %v148, %v149
    %151 = vadd.xlane.f32.xlu0 %v150
    %v152 = vpop.xlane.xlu0 %151
    %v153 = vld [vmem:[#allocation8] sm:$0xff]
    %v154 = vld [vmem:[%s5] sm:$0xf]
    %v156 = vperm.slane %v154, 0
    %v157 = vperm.slane %v154, 1
    %v158 = vperm.slane %v154, 2
    %v159 = vperm.slane %v154, 3
    %v160 = vrot.slane %v157, 6
    %v161 = vrot.slane %v158, 4
    %v162 = vrot.slane %v159, 2
    %v163 = vsel %vm138, %v156, %v160
    %vm164 = vcmask 1045508
    %v165 = vsel %vm164, %v161, %v162
    %vm166 = vcmask 1043456
    %v167 = vsel %vm166, %v163, %v165
    %v169 = vmul.f32 %v153, %v167
    %171 = vst [vmem:[#allocation1] ss:$4 sm:$0xff] %v169
    %v172 = vld.sshfl [vmem:[#allocation1] sm:$0xff pattern:$0x73625140]
    %v173 = vld.sshfl [vmem:[#allocation1 + $0x8] sm:$0xff pattern:$0x73625140]
    %v174 = vld.sshfl [vmem:[#allocation1 + $0x10] sm:$0xff pattern:$0x73625140]
    %v175 = vld.sshfl [vmem:[#allocation1 + $0x18] sm:$0xff pattern:$0x73625140]
    %v180 = vsel %vm138, %v172, 0.0
    %v181 = vsel %vm138, %v173, 0.0
    %v182 = vadd.f32 %v180, %v181
    %v183 = vsel %vm138, %v174, 0.0
    %v184 = vadd.f32 %v182, %v183
    %v185 = vsel %vm138, %v175, 0.0
    %v186 = vadd.f32 %v184, %v185
    %187 = vadd.xlane.f32.xlu0 %v186
    %v188 = vpop.xlane.xlu0 %187
    %v189 = vld [vmem:[#allocation9] sm:$0xff]
    %v190 = vld [vmem:[#allocation9 + $0x8] sm:$0xff]
    %v191 = vld [vmem:[#allocation9 + $0x10] sm:$0xff]
    %v192 = vld [vmem:[#allocation9 + $0x18] sm:$0xff]
    %v193 = vld [vmem:[#allocation9 + $0x20] sm:$0xff]
    %v194 = vld [vmem:[#allocation9 + $0x28] sm:$0xff]
    %v195 = vld [vmem:[#allocation9 + $0x30] sm:$0xff]
    %v196 = vld [vmem:[#allocation9 + $0x38] sm:$0xff]
    %v197 = vld [vmem:[#allocation12] sm:$0xff]
    %v198 = vld [vmem:[#allocation12 + $0x8] sm:$0xff]
    %v199 = vld [vmem:[#allocation12 + $0x10] sm:$0xff]
    %v200 = vld [vmem:[#allocation12 + $0x18] sm:$0xff]
    %v201 = vmul.f32 %v189, %v197
    %v202 = vmul.f32 %v190, %v198
    %v203 = vmul.f32 %v191, %v199
    %v204 = vmul.f32 %v192, %v200
    %v205 = vmul.f32 %v193, %v197
    %v206 = vmul.f32 %v194, %v198
    %v207 = vmul.f32 %v195, %v199
    %v208 = vmul.f32 %v196, %v200
    %vm209 = vcmask 523264
    %v210 = vsel %vm209, %v201, 0.0
    %v211 = vsel %vm209, %v202, 0.0
    %v212 = vadd.f32 %v210, %v211
    %v213 = vsel %vm209, %v203, 0.0
    %v214 = vadd.f32 %v212, %v213
    %v215 = vsel %vm209, %v204, 0.0
    %v216 = vadd.f32 %v214, %v215
    %v217 = vrot.slane %v216, 4
    %v218 = vadd.f32 %v216, %v217
    %v219 = vrot.slane %v218, 2
    %v220 = vadd.f32 %v218, %v219
    %v221 = vrot.slane %v220, 1
    %v222 = vadd.f32 %v220, %v221
    %v223 = vsel %vm209, %v205, 0.0
    %v224 = vsel %vm209, %v206, 0.0
    %v225 = vadd.f32 %v223, %v224
    %v226 = vsel %vm209, %v207, 0.0
    %v227 = vadd.f32 %v225, %v226
    %v228 = vsel %vm209, %v208, 0.0
    %v229 = vadd.f32 %v227, %v228
    %v230 = vrot.slane %v229, 4
    %v231 = vadd.f32 %v229, %v230
    %v232 = vrot.slane %v231, 2
    %v233 = vadd.f32 %v231, %v232
    %v234 = vrot.slane %v233, 1
    %v235 = vadd.f32 %v233, %v234
    %s236 = sld [smem:[#allocation14 + $0x2]]
    %v237 = vstv %s236
    %v238 = vadd.f32 %v222, %v237
    %v239 = vadd.f32 %v235, %v237
    %v240 = vmax.f32 %v238, 0.0
    %v241 = vmax.f32 %v239, 0.0
    %v242 = vld [vmem:[%s7] sm:$0x1]
    %v244 = vperm.slane %v242, 0
    %v246 = vmul.f32 %v240, %v244
    %v247 = vmul.f32 %v241, %v244
    %v250 = vrot.slane %v247, 7
    %vm251 = vcmask 1041409
    %v252 = vsel %vm251, %v250, %v246
    %vm254 = vcmask 517120
    %v255 = vsel %vm254, %v252, 0.0
    %256 = vadd.xlane.f32.xlu0 %v255
    %v257 = vpop.xlane.xlu0 %256
    %v258 = vld [vmem:[#allocation2] sm:$0x1]
    %v260 = vperm.slane %v152, 0
    %v261 = vperm.slane %v152, 1
    %262 = vst [vmem:[#allocation1] ss:$9 sm:$0xff] %v260
    %s263 = scalar_lea.vmem [#allocation1], 1
    %264 = vst [vmem:[%s263] ss:$9 sm:$0xff] %v261
    %v265 = vld [vmem:[#allocation1] sm:$0xff]
    %266 = vset.pattern.permute.xlu0 0
    %267 = vperm.xlu0 %266, %v265
    %v268 = vpop.permute.xlu0 %267
    %v269 = vlaneseq
    %v270 = vand.u32 %v269, 127
    %v271 = vperm.slane %v268, %v270
    %v273 = vadd.f32 %v258, %v271
    %v275 = vperm.slane %v188, 0
    %v276 = vperm.slane %v188, 1
    %277 = vst [vmem:[#allocation1] ss:$9 sm:$0xff] %v275
    %s278 = scalar_lea.vmem [#allocation1], 1
    %279 = vst [vmem:[%s278] ss:$9 sm:$0xff] %v276
    %v280 = vld [vmem:[#allocation1] sm:$0xff]
    %281 = vset.pattern.permute.xlu0 0
    %282 = vperm.xlu0 %281, %v280
    %v283 = vpop.permute.xlu0 %282
    %v284 = vperm.slane %v283, %v270
    %v286 = vadd.f32 %v273, %v284
    %v288 = vperm.slane %v257, 0
    %v289 = vperm.slane %v257, 1
    %290 = vst [vmem:[#allocation1] ss:$9 sm:$0xff] %v288
    %s291 = scalar_lea.vmem [#allocation1], 1
    %292 = vst [vmem:[%s291] ss:$9 sm:$0xff] %v289
    %v293 = vld [vmem:[#allocation1] sm:$0xff]
    %294 = vset.pattern.permute.xlu0 0
    %295 = vperm.xlu0 %294, %v293
    %v296 = vpop.permute.xlu0 %295
    %v297 = vperm.slane %v296, %v270
    %v299 = vadd.f32 %v286, %v297
    %s300 = sld [smem:[#allocation14]]
    %v301 = vstv %s300
    %v302 = vadd.f32 %v299, %v301
    %s303 = sld [smem:[#allocation14 + $0x1]]
    %v304 = vstv %s303
    %v305 = vadd.f32 %v302, %v304
    %s306 = sld [smem:[#allocation14 + $0x3]]
    %v307 = vstv %s306
    %v308 = vadd.f32 %v305, %v307
    %vm309 = vcmask 8192
    %310 = vst.msk [vmem:[#allocation15] sm:$0x1] %vm309, %v308
    // Predicated region
    $region66: #{tpu_custom_call.1} parent=1 // pred_check
      _
    $region67: #{tpu_custom_call.1} parent=1 // pred_check_branch
      %312 = sbr.rel (0) target = $region69
    $region68: #{tpu_custom_call.1} parent=1 // pred_region
      %314 = vsyncadd [#allocation4], 0
      %s316 = sshll.u32 [#allocation15], 4
      %s317 = int_to_ptr.vmem [resolvable:$true] %s316
      %s318 = sshll.u32 %s9, 4
      %s319 = int_to_ptr.hbm [resolvable:$true] %s318
      %321 = dma.vmem_to_hbm [thread:$0]  %s317, 16, %s319, [#allocation4]
    $region69: #{tpu_custom_call.1} parent=1 // pred_fallthru
      _
    // Predicated region
    $region70: #{tpu_custom_call.1} parent=1 // pred_check
      _
    $region71: #{tpu_custom_call.1} parent=1 // pred_check_branch
      %323 = sbr.rel (0) target = $region73
    $region72: #{tpu_custom_call.1} parent=1 // pred_region
      %325 = dma.done [#allocation4], 16
    $region73: #{tpu_custom_call.1} parent=1 // pred_fallthru
      _
    %326 = vsyncpa [#allocation3], 1
    %327 = vsyncpa [#allocation7], 1
    %328 = vsyncpa [#allocation10], 1
    %329 = vsyncpa [#allocation13], 1
    %330 = vsyncpa [#allocation4], 1
    %331 = vsyncpa [#allocation5], 1

</llo_original>
